<compile_context>
chip_gen: v5e
topology: v5e:2x2
jax: 0.10.0
libtpu: 0.0.40
codegen_flags: <defaults>
</compile_context>

<pallas_src>
import jax
import jax.numpy as jnp
from jax import lax
from jax.experimental import pallas as pl
from jax.experimental.pallas import tpu as pltpu


def _round_up(v, m):
    return (v + m - 1) // m * m


def _hidden_layer_kernel(x_ref, w_ref, b_ref, o_ref, acc_ref):
    # x_ref:  (tm, tk)  activation tile
    # w_ref:  (tn, tk)  weight tile in PyTorch (OUT, IN) layout -> contract dim 1
    # b_ref:  (1,  tn)  bias tile for this N block
    # o_ref:  (tm, tn)  output tile
    # acc_ref:(tm, tn)  f32 accumulator scratch, persistent across K steps
    k = pl.program_id(2)

    @pl.when(k == 0)
    def _():
        acc_ref[...] = jnp.zeros_like(acc_ref)

    # x @ W^T without materializing a transposed weight: contract last dims.
    acc_ref[...] += lax.dot_general(
        x_ref[...],
        w_ref[...],
        dimension_numbers=(((1,), (1,)), ((), ())),
        preferred_element_type=jnp.float32,
    )

    @pl.when(k == pl.num_programs(2) - 1)
    def _():
        # Epilogue: bias add + ReLU once, then cast to output dtype.
        o_ref[...] = jnp.maximum(acc_ref[...] + b_ref[...], 0.0).astype(o_ref.dtype)


def hidden_layer(x, weight, bias, *, tm=256, tn=256, tk=512):
    """Equivalent to torch: relu(F.linear(x, weight, bias)).

    x:      (B, IN)   float32
    weight: (OUT, IN) float32  (PyTorch nn.Linear convention; NOT transposed)
    bias:   (OUT,)    float32
    """
    B, IN = x.shape
    OUT = weight.shape[0]
    dtype = x.dtype
    itemsize = jnp.dtype(dtype).itemsize

    # Clamp tiles to the (aligned) problem size; keep (8, 128) alignment.
    tm = min(tm, _round_up(B, 8))
    tn = min(tn, _round_up(OUT, 128))
    tk = min(tk, _round_up(IN, 128))

    Mp = _round_up(B, tm)
    Np = _round_up(OUT, tn)
    Kp = _round_up(IN, tk)

    # Zero-pad up to tile multiples (zeros contribute nothing to the matmul;
    # padded OUT columns are sliced away afterwards).
    xp = x if (Mp == B and Kp == IN) else jnp.pad(x, ((0, Mp - B), (0, Kp - IN)))
    wp = (
        weight
        if (Np == OUT and Kp == IN)
        else jnp.pad(weight, ((0, Np - OUT), (0, Kp - IN)))
    )
    bp = (bias if Np == OUT else jnp.pad(bias, (0, Np - OUT))).reshape(1, Np)

    grid = (Mp // tm, Np // tn, Kp // tk)

    cost = pl.CostEstimate(
        flops=2 * B * IN * OUT,
        transcendentals=0,
        bytes_accessed=(x.size + weight.size + bias.size + B * OUT) * itemsize,
    )

    out_p = pl.pallas_call(
        _hidden_layer_kernel,
        out_shape=jax.ShapeDtypeStruct((Mp, Np), dtype),
        grid_spec=pltpu.PrefetchScalarGridSpec(
            num_scalar_prefetch=0,
            grid=grid,
            in_specs=[
                pl.BlockSpec((tm, tk), lambda i, j, k: (i, k)),   # x
                pl.BlockSpec((tn, tk), lambda i, j, k: (j, k)),   # weight (OUT, IN)
                pl.BlockSpec((1, tn), lambda i, j, k: (0, j)),    # bias
            ],
            out_specs=pl.BlockSpec((tm, tn), lambda i, j, k: (i, j)),
            scratch_shapes=[pltpu.VMEM((tm, tn), jnp.float32)],
        ),
        compiler_params=pltpu.CompilerParams(
            dimension_semantics=("parallel", "parallel", "arbitrary"),
        ),
        cost_estimate=cost,
    )(xp, wp, bp)

    if Mp == B and Np == OUT:
        return out_p
    return out_p[:B, :OUT]


if __name__ == "__main__":
    # Small shapes consistent with nn.Linear(input_size, output_size)
    batch, input_size, output_size = 8, 32, 16

    key = jax.random.PRNGKey(0)
    kx, kw, kb = jax.random.split(key, 3)

    x = jax.random.normal(kx, (batch, input_size), dtype=jnp.float32)
    weight = jax.random.normal(kw, (output_size, input_size), dtype=jnp.float32) * 0.1
    bias = jax.random.normal(kb, (output_size,), dtype=jnp.float32) * 0.1

    y = hidden_layer(x, weight, bias)
    y = jax.block_until_ready(y)

    # Reference check in plain JAX
    y_ref = jnp.maximum(x @ weight.T + bias, 0.0)
    assert y.shape == (batch, output_size)
    assert jnp.allclose(y, y_ref, atol=1e-5, rtol=1e-5)

    # Also exercise a larger, multi-tile case to validate the tiled path.
    B2, IN2, OUT2 = 512, 1024, 640
    k2x, k2w, k2b = jax.random.split(jax.random.PRNGKey(1), 3)
    x2 = jax.random.normal(k2x, (B2, IN2), dtype=jnp.float32)
    w2 = jax.random.normal(k2w, (OUT2, IN2), dtype=jnp.float32) * 0.02
    b2 = jax.random.normal(k2b, (OUT2,), dtype=jnp.float32) * 0.02
    y2 = jax.block_until_ready(hidden_layer(x2, w2, b2))
    y2_ref = jnp.maximum(x2 @ w2.T + b2, 0.0)
    assert jnp.allclose(y2, y2_ref, atol=1e-3, rtol=1e-3)

    print("KERNEL_OK")
</pallas_src>

<mosaic_0001>
module attributes {stable_mosaic.version = 11 : i64} {
  func.func @_hidden_layer_kernel(%arg0: i32, %arg1: i32, %arg2: i32, %arg3: memref<8x128xf32, #tpu.memory_space<vmem>>, %arg4: memref<128x128xf32, #tpu.memory_space<vmem>>, %arg5: memref<1x128xf32, #tpu.memory_space<vmem>>, %arg6: memref<8x128xf32, #tpu.memory_space<vmem>>, %arg7: memref<8x128xf32, #tpu.memory_space<vmem>>) attributes {dimension_semantics = [#tpu.dimension_semantics<parallel>, #tpu.dimension_semantics<parallel>, #tpu.dimension_semantics<arbitrary>], iteration_bounds = array<i64: 1, 1, 1>, scalar_prefetch = 0 : i64, scratch_operands = 1 : i64, tpu.core_type = #tpu.core_type<tc>, window_params = [{transform_indices = @transform_0, window_bounds = array<i64: 8, 128>}, {transform_indices = @transform_1, window_bounds = array<i64: 128, 128>}, {transform_indices = @transform_2, window_bounds = array<i64: 1, 128>}, {transform_indices = @transform_3, window_bounds = array<i64: 8, 128>}]} {
    %c0_i32 = arith.constant 0 : i32
    %0 = arith.cmpi eq, %arg2, %c0_i32 : i32
    %1 = arith.extui %0 : i1 to i32
    %c0_i32_0 = arith.constant 0 : i32
    %2 = arith.cmpi ne, %1, %c0_i32_0 : i32
    scf.if %2 {
      %cst_10 = arith.constant 0.000000e+00 : f32
      %12 = vector.broadcast %cst_10 : f32 to vector<8x128xf32>
      %c0_11 = arith.constant 0 : index
      %c0_12 = arith.constant 0 : index
      %13 = vector.load %arg7[%c0_11, %c0_12] : memref<8x128xf32, #tpu.memory_space<vmem>>, vector<8x128xf32>
      tpu.vector_store %arg7[%c0_11, %c0_12], %12 {strides = array<i32>} : memref<8x128xf32, #tpu.memory_space<vmem>>, vector<8x128xf32>,
    } else {
    }
    %c0 = arith.constant 0 : index
    %c0_1 = arith.constant 0 : index
    %3 = vector.load %arg7[%c0, %c0_1] : memref<8x128xf32, #tpu.memory_space<vmem>>, vector<8x128xf32>
    %c0_2 = arith.constant 0 : index
    %c0_3 = arith.constant 0 : index
    %4 = vector.load %arg3[%c0_2, %c0_3] : memref<8x128xf32, #tpu.memory_space<vmem>>, vector<8x128xf32>
    %c0_4 = arith.constant 0 : index
    %c0_5 = arith.constant 0 : index
    %5 = vector.load %arg4[%c0_4, %c0_5] : memref<128x128xf32, #tpu.memory_space<vmem>>, vector<128x128xf32>
    %cst = arith.constant dense<0.000000e+00> : vector<8x128xf32>
    %6 = tpu.matmul %4, %5, %cst {dimension_numbers = #tpu.dot_dimension_numbers<[1], [1], [0], [0], [0, 0, 1, 0], [], []>} : vector<8x128xf32>, vector<128x128xf32>, vector<8x128xf32> -> vector<8x128xf32>
    %7 = arith.addf %3, %6 : vector<8x128xf32>
    %c0_6 = arith.constant 0 : index
    %c0_7 = arith.constant 0 : index
    %8 = vector.load %arg7[%c0_6, %c0_7] : memref<8x128xf32, #tpu.memory_space<vmem>>, vector<8x128xf32>
    tpu.vector_store %arg7[%c0_6, %c0_7], %7 {strides = array<i32>} : memref<8x128xf32, #tpu.memory_space<vmem>>, vector<8x128xf32>,
    %c0_i32_8 = arith.constant 0 : i32
    %9 = arith.cmpi eq, %arg2, %c0_i32_8 : i32
    %10 = arith.extui %9 : i1 to i32
    %c0_i32_9 = arith.constant 0 : i32
    %11 = arith.cmpi ne, %10, %c0_i32_9 : i32
    scf.if %11 {
      %c0_10 = arith.constant 0 : index
      %c0_11 = arith.constant 0 : index
      %12 = vector.load %arg7[%c0_10, %c0_11] : memref<8x128xf32, #tpu.memory_space<vmem>>, vector<8x128xf32>
      %c0_12 = arith.constant 0 : index
      %c0_13 = arith.constant 0 : index
      %13 = vector.load %arg5[%c0_12, %c0_13] : memref<1x128xf32, #tpu.memory_space<vmem>>, vector<1x128xf32>
      %14 = vector.broadcast %13 : vector<1x128xf32> to vector<8x128xf32>
      %15 = arith.addf %12, %14 : vector<8x128xf32>
      %cst_14 = arith.constant 0.000000e+00 : f32
      %16 = vector.broadcast %cst_14 : f32 to vector<8x128xf32>
      %17 = arith.maximumf %15, %16 : vector<8x128xf32>
      %c0_15 = arith.constant 0 : index
      %c0_16 = arith.constant 0 : index
      %18 = vector.load %arg6[%c0_15, %c0_16] : memref<8x128xf32, #tpu.memory_space<vmem>>, vector<8x128xf32>
      tpu.vector_store %arg6[%c0_15, %c0_16], %17 {strides = array<i32>} : memref<8x128xf32, #tpu.memory_space<vmem>>, vector<8x128xf32>,
    } else {
    }
    return
  }
  func.func @transform_0(%arg0: i32, %arg1: i32, %arg2: i32) -> (i32, i32) {
    %c0_i32 = arith.constant 0 : i32
    return %arg0, %arg2 : i32, i32
  }
  func.func @transform_1(%arg0: i32, %arg1: i32, %arg2: i32) -> (i32, i32) {
    %c0_i32 = arith.constant 0 : i32
    return %arg1, %arg2 : i32, i32
  }
  func.func @transform_2(%arg0: i32, %arg1: i32, %arg2: i32) -> (i32, i32) {
    %c0_i32 = arith.constant 0 : i32
    %c0_i32_0 = arith.constant 0 : i32
    return %c0_i32, %arg1 : i32, i32
  }
  func.func @transform_3(%arg0: i32, %arg1: i32, %arg2: i32) -> (i32, i32) {
    %c0_i32 = arith.constant 0 : i32
    return %arg0, %arg1 : i32, i32
  }
}

</mosaic_0001>

<llo_original>
// kernel: tpu_custom_call.1
$region0: #{tpu_custom_call.1}
  #allocation0 [shape = 'u32[]', space=smem, size = 0x4, offset = 0x4, fixed_abs, tag = 'smem constant byte address 0x4 - core index']
  #allocation1 [shape = 'u32[72,128]{1,0:T(1,128)}', space=vmem, size = 0x9000, scoped, tag = 'internal scratch']
  #allocation2 [shape = 'f32[8,128]{1,0:T(8,128)}', space=vmem, size = 0x1000, scoped, tag = 'scratch operand']
  %s0 = inlined_call_operand.hbm [shape: f32[8,128], index: 0, kind: input, shape index: {}]
  %s1 = inlined_call_operand.hbm [shape: f32[128,128], index: 1, kind: input, shape index: {}]
  %s2 = inlined_call_operand.vmem [shape: f32[1,128], index: 2, kind: input, shape index: {}]
  %s3 = inlined_call_operand.hbm [shape: f32[8,128], index: 3, kind: output, shape index: {}]
  %s4 = sld [smem:[#allocation0]]
  $region38: #{tpu_custom_call.1} parent=0
    _
  %s6 = ssub.s32 1, %s4
  %s7 = scalar_select 0, %s6, %s4
  $region1: #{tpu_custom_call.1} parent=0
    #allocation3 [shape = 'u8[4096]{0}', space=vmem, size = 0x1000, scoped, tag = 'input window, operand 0, single buffered']
    #allocation4 [shape = 's32[1]{0}', space=sflag, size = 0x4, scoped, tag = 'scoped memory for tpu_custom_call.1']
    #allocation5 [shape = 's32[1]{0}', space=sflag, size = 0x4, scoped, tag = 'scoped memory for tpu_custom_call.1']
    #allocation6 [shape = 'u8[65536]{0}', space=vmem, size = 0x10000, scoped, tag = 'input window, operand 1, single buffered']
    #allocation7 [shape = 's32[1]{0}', space=sflag, size = 0x4, scoped, tag = 'scoped memory for tpu_custom_call.1']
    #allocation8 [shape = 'u8[4096]{0}', space=vmem, size = 0x1000, scoped, tag = 'output window, operand 0, single buffered']
    %8 = vsyncpa [#allocation4], 0
    %9 = vsyncpa [#allocation7], 0
    %10 = vsyncpa [#allocation5], 0
    // Predicated region
    $region2: #{tpu_custom_call.1} parent=1 // pred_check
      _
    $region3: #{tpu_custom_call.1} parent=1 // pred_check_branch
      %12 = sbr.rel (0) target = $region5
    $region4: #{tpu_custom_call.1} parent=1 // pred_region
      %14 = vsyncadd [#allocation4], 0
      %s16 = sshll.u32 %s0, 4
      %s17 = int_to_ptr.hbm [resolvable:$true] %s16
      %s18 = sshll.u32 [#allocation3], 4
      %s19 = int_to_ptr.vmem [resolvable:$true] %s18
      %21 = dma.hbm_to_vmem [thread:$0]  %s17, 128, %s19, [#allocation4]
    $region5: #{tpu_custom_call.1} parent=1 // pred_fallthru
      _
    // Predicated region
    $region6: #{tpu_custom_call.1} parent=1 // pred_check
      _
    $region7: #{tpu_custom_call.1} parent=1 // pred_check_branch
      %23 = sbr.rel (0) target = $region9
    $region8: #{tpu_custom_call.1} parent=1 // pred_region
      %25 = vsyncadd [#allocation7], 0
      %s26 = sshll.u32 %s1, 4
      %s27 = int_to_ptr.hbm [resolvable:$true] %s26
      %s28 = sshll.u32 [#allocation6], 4
      %s29 = int_to_ptr.vmem [resolvable:$true] %s28
      %34 = dma.hbm_to_vmem [thread:$0]  %s27, 2048, %s29, [#allocation7], 128, 128, 8
    $region9: #{tpu_custom_call.1} parent=1 // pred_fallthru
      _
    // Predicated region
    $region10: #{tpu_custom_call.1} parent=1 // pred_check
      _
    $region11: #{tpu_custom_call.1} parent=1 // pred_check_branch
      %36 = sbr.rel (0) target = $region13
    $region12: #{tpu_custom_call.1} parent=1 // pred_region
      _
    $region13: #{tpu_custom_call.1} parent=1 // pred_fallthru
      _
    // Predicated region
    $region14: #{tpu_custom_call.1} parent=1 // pred_check
      _
    $region15: #{tpu_custom_call.1} parent=1 // pred_check_branch
      %38 = sbr.rel (0) target = $region17
    $region16: #{tpu_custom_call.1} parent=1 // pred_region
      %40 = dma.done [#allocation4], 128
    $region17: #{tpu_custom_call.1} parent=1 // pred_fallthru
      _
    // Predicated region
    $region18: #{tpu_custom_call.1} parent=1 // pred_check
      _
    $region19: #{tpu_custom_call.1} parent=1 // pred_check_branch
      %42 = sbr.rel (0) target = $region21
    $region20: #{tpu_custom_call.1} parent=1 // pred_region
      %44 = dma.done [#allocation7], 2048
    $region21: #{tpu_custom_call.1} parent=1 // pred_fallthru
      _
    %p45 = scmp.eq.s32.totalorder 0, 0
    // Predicated region
    $region22: #{tpu_custom_call.1} parent=1 // pred_check
      %p46 = pneg %p45
    $region23: #{tpu_custom_call.1} parent=1 // pred_check_branch
      %48 = sbr.rel (%p46) target = $region25
    $region24: #{tpu_custom_call.1} parent=1 // pred_region
      %49 = vst [vmem:[#allocation2] sm:$0xff] 0.0
    $region25: #{tpu_custom_call.1} parent=1 // pred_fallthru
      _
    %v50 = vld [vmem:[#allocation2] sm:$0xff]
    %v51 = vld [vmem:[#allocation3] sm:$0xff]
    %v52 = vld [vmem:[#allocation6] sm:$0xff]
    %v53 = vld [vmem:[#allocation6 + $0x8] sm:$0xff]
    %v54 = vld [vmem:[#allocation6 + $0x10] sm:$0xff]
    %v55 = vld [vmem:[#allocation6 + $0x18] sm:$0xff]
    %v56 = vld [vmem:[#allocation6 + $0x20] sm:$0xff]
    %v57 = vld [vmem:[#allocation6 + $0x28] sm:$0xff]
    %v58 = vld [vmem:[#allocation6 + $0x30] sm:$0xff]
    %v59 = vld [vmem:[#allocation6 + $0x38] sm:$0xff]
    %v60 = vld [vmem:[#allocation6 + $0x40] sm:$0xff]
    %v61 = vld [vmem:[#allocation6 + $0x48] sm:$0xff]
    %v62 = vld [vmem:[#allocation6 + $0x50] sm:$0xff]
    %v63 = vld [vmem:[#allocation6 + $0x58] sm:$0xff]
    %v64 = vld [vmem:[#allocation6 + $0x60] sm:$0xff]
    %v65 = vld [vmem:[#allocation6 + $0x68] sm:$0xff]
    %v66 = vld [vmem:[#allocation6 + $0x70] sm:$0xff]
    %v67 = vld [vmem:[#allocation6 + $0x78] sm:$0xff]
    %68 = vmatpush.xpose.msra.mxu0 %v67
    %69 = vmatpush.xpose.msra.mxu0 %v66
    %70 = vmatpush.xpose.msra.mxu0 %v65
    %71 = vmatpush.xpose.msra.mxu0 %v64
    %72 = vmatpush.xpose.msra.mxu0 %v63
    %73 = vmatpush.xpose.msra.mxu0 %v62
    %74 = vmatpush.xpose.msra.mxu0 %v61
    %75 = vmatpush.xpose.msra.mxu0 %v60
    %76 = vmatpush.xpose.msra.mxu0 %v59
    %77 = vmatpush.xpose.msra.mxu0 %v58
    %78 = vmatpush.xpose.msra.mxu0 %v57
    %79 = vmatpush.xpose.msra.mxu0 %v56
    %80 = vmatpush.xpose.msra.mxu0 %v55
    %81 = vmatpush.xpose.msra.mxu0 %v54
    %82 = vmatpush.xpose.msra.mxu0 %v53
    %83 = vmatpush.xpose.msra.mxu0 %v52
    %84 = vmatmul.f32.gmra.mxu0 %v51
    %v85 = vpop.f32.mrf.mxu0
    %v86 = vadd.f32 0.0, %v85
    %87 = vdwg.mxu0
    %v88 = vadd.f32 %v50, %v86
    %89 = vst [vmem:[#allocation2] sm:$0xff] %v88
    // Predicated region
    $region26: #{tpu_custom_call.1} parent=1 // pred_check
      %p90 = pneg %p45
    $region27: #{tpu_custom_call.1} parent=1 // pred_check_branch
      %92 = sbr.rel (%p90) target = $region29
    $region28: #{tpu_custom_call.1} parent=1 // pred_region
      %v93 = vld [vmem:[#allocation2] sm:$0xff]
      %v94 = vld [vmem:[%s2] sm:$0x1]
      %v96 = vperm.slane %v94, 0
      %v98 = vadd.f32 %v93, %v96
      %v99 = vmax.f32 %v98, 0.0
      %100 = vst [vmem:[#allocation8] sm:$0xff] %v99
    $region29: #{tpu_custom_call.1} parent=1 // pred_fallthru
      _
    // Predicated region
    $region30: #{tpu_custom_call.1} parent=1 // pred_check
      _
    $region31: #{tpu_custom_call.1} parent=1 // pred_check_branch
      %102 = sbr.rel (0) target = $region33
    $region32: #{tpu_custom_call.1} parent=1 // pred_region
      %104 = vsyncadd [#allocation5], 0
      %s106 = sshll.u32 [#allocation8], 4
      %s107 = int_to_ptr.vmem [resolvable:$true] %s106
      %s108 = sshll.u32 %s3, 4
      %s109 = int_to_ptr.hbm [resolvable:$true] %s108
      %111 = dma.vmem_to_hbm [thread:$0]  %s107, 128, %s109, [#allocation5]
    $region33: #{tpu_custom_call.1} parent=1 // pred_fallthru
      _
    // Predicated region
    $region34: #{tpu_custom_call.1} parent=1 // pred_check
      _
    $region35: #{tpu_custom_call.1} parent=1 // pred_check_branch
      %113 = sbr.rel (0) target = $region37
    $region36: #{tpu_custom_call.1} parent=1 // pred_region
      %115 = dma.done [#allocation5], 128
    $region37: #{tpu_custom_call.1} parent=1 // pred_fallthru
      _
    %116 = vsyncpa [#allocation4], 1
    %117 = vsyncpa [#allocation7], 1
    %118 = vsyncpa [#allocation5], 1

</llo_original>
